<compile_context>
chip_gen: v5e
topology: v5e:2x2
jax: 0.10.0
libtpu: 0.0.40
codegen_flags: <defaults>
</compile_context>

<pallas_src>
import numpy as np
import jax
import jax.numpy as jnp
from jax.experimental import pallas as pl
from jax.experimental.pallas import tpu as pltpu

# --- model hyper-parameters ------------------------------------------------------------
INPUT_DIM = 16
OUTPUT_DIM = 32
NUM_NODES = 8            # fills the 8-sublane dimension exactly
NUM_GRAPHS = 16          # graphs batched per pallas_call
NEG_SLOPE = 0.2          # GATConv default negative_slope
NEG_INF = -1e30

C_PAD = 128              # lane-dense output / parameter width (>= OUTPUT_DIM)
ROW_W = 0                # packed-parameter row layout (all 8-sublane aligned)
ROW_ASRC = INPUT_DIM     # 16
ROW_ADST = INPUT_DIM + 8 # 24
ROW_BIAS = INPUT_DIM + 16  # 32
P_ROWS = INPUT_DIM + 24  # 40


# ------------------------------- fused GATConv kernel ----------------------------------
def gat_kernel(x_ref, mask_ref, p_ref, o_ref):
    # Packed parameters (static, 8-aligned row slices -> cheap views/loads).
    w    = p_ref[ROW_W:ROW_W + INPUT_DIM, :]      # (D, 128), zero-padded past OUTPUT_DIM
    asrc = p_ref[ROW_ASRC:ROW_ASRC + 1, :]        # (1, 128)
    adst = p_ref[ROW_ADST:ROW_ADST + 1, :]        # (1, 128)
    bias = p_ref[ROW_BIAS:ROW_BIAS + 1, :]        # (1, 128)

    # Linear projection (no bias in GATConv's internal Linear):  h = x @ W   (N, 128)
    h = jnp.dot(x_ref[...], w, preferred_element_type=jnp.float32)

    # Per-node attention logits straight from MXU contractions over the feature dim:
    #   a_src_row[0, j] = <h_j, att_src>,   a_dst_col[i, 0] = <h_i, att_dst>
    a_src_row = jax.lax.dot_general(asrc, h, (((1,), (1,)), ((), ())),
                                    preferred_element_type=jnp.float32)   # (1, N)
    a_dst_col = jax.lax.dot_general(h, adst, (((1,), (1,)), ((), ())),
                                    preferred_element_type=jnp.float32)   # (N, 1)

    # Edge logits e[i, j] = LeakyReLU(a_dst[i] + a_src[j]); mask out non-edges
    # (mask already contains the self loops).
    logits = a_dst_col + a_src_row                                        # (N, N)
    logits = jnp.where(logits > 0, logits, NEG_SLOPE * logits)            # LeakyReLU(0.2)
    logits = jnp.where(mask_ref[...] > 0, logits, NEG_INF)

    # Masked softmax over source nodes (per destination row); masked entries underflow
    # to exactly 0 after exp, so no extra "* mask" is needed.
    m = jnp.max(logits, axis=-1, keepdims=True)
    p = jnp.exp(logits - m)
    denom = jnp.sum(p, axis=-1, keepdims=True)
    r = pl.reciprocal(denom, approx=True)      # EUP slot
    r = r * (2.0 - denom * r)                  # one Newton step -> full f32 accuracy
    alpha = p * r

    # Aggregate neighbourhood features and add the output bias; (N, 128) unmasked store.
    o_ref[...] = jnp.dot(alpha, h, preferred_element_type=jnp.float32) + bias


# ------------------------------- wrappers -----------------------------------------------
def pack_params(params):
    """Pack W / att_src / att_dst / bias into one (P_ROWS, 128) zero-padded buffer.
    Done once; parameters are static across forward calls."""
    p = jnp.zeros((P_ROWS, C_PAD), jnp.float32)
    p = p.at[ROW_W:ROW_W + INPUT_DIM, :OUTPUT_DIM].set(params["w"])
    p = p.at[ROW_ASRC, :OUTPUT_DIM].set(params["att_src"][0])
    p = p.at[ROW_ADST, :OUTPUT_DIM].set(params["att_dst"][0])
    p = p.at[ROW_BIAS, :OUTPUT_DIM].set(params["bias"][0])
    return p


def dense_mask(edge_index, num_nodes):
    """{0,1} dense adjacency with self loops: mask[i, j] = 1 iff edge j -> i or i == j.
    Hoisted out of the kernel; for a static graph this is computed once and reused."""
    src = edge_index[0]
    dst = edge_index[1]
    node = jnp.arange(num_nodes, dtype=edge_index.dtype)
    src_oh = (node[:, None] == src[None, :]).astype(jnp.float32)   # (N, E)
    dst_oh = (node[:, None] == dst[None, :]).astype(jnp.float32)   # (N, E)
    adj = dst_oh @ src_oh.T                                        # (N, N) edge counts
    eye = jnp.eye(num_nodes, dtype=jnp.float32)
    return jnp.minimum(adj + eye, 1.0)


def gat_forward_batched(x_b, mask_b, packed_params):
    """Run the fused GATConv on B graphs in one pallas_call (grid=(B,), one graph/step)."""
    B, N, D = x_b.shape
    assert mask_b.shape == (B, N, N)
    x_flat = x_b.reshape(B * N, D)
    m_flat = mask_b.reshape(B * N, N)
    out = pl.pallas_call(
        gat_kernel,
        out_shape=jax.ShapeDtypeStruct((B * N, C_PAD), jnp.float32),
        grid_spec=pltpu.PrefetchScalarGridSpec(
            num_scalar_prefetch=0,
            grid=(B,),
            in_specs=[
                pl.BlockSpec((N, D), lambda b: (b, 0)),          # per-graph features
                pl.BlockSpec((N, N), lambda b: (b, 0)),          # per-graph dense mask
                pl.BlockSpec((P_ROWS, C_PAD), lambda b: (0, 0)), # shared packed params
            ],
            out_specs=pl.BlockSpec((N, C_PAD), lambda b: (b, 0)),
        ),
        compiler_params=pltpu.CompilerParams(
            dimension_semantics=("parallel",)),
    )(x_flat, m_flat, packed_params)
    return out.reshape(B, N, C_PAD)[:, :, :OUTPUT_DIM]


def gat_forward(x, edge_index, packed_params):
    """Module-equivalent single-graph forward: GATNetwork(x, edge_index)."""
    mask = dense_mask(edge_index, x.shape[0])
    return gat_forward_batched(x[None], mask[None], packed_params)[0]


# ------------------------------- reference (numpy, edge-list form) ---------------------
def reference_forward(x, edge_index, params):
    x = np.asarray(x, np.float32)
    ei = np.asarray(edge_index)
    w = np.asarray(params["w"], np.float32)
    a_s = np.asarray(params["att_src"], np.float32)[0]
    a_d = np.asarray(params["att_dst"], np.float32)[0]
    b = np.asarray(params["bias"], np.float32)[0]
    N = x.shape[0]

    h = x @ w                                           # (N, C)
    keep = ei[0] != ei[1]                               # remove_self_loops
    src = np.concatenate([ei[0][keep], np.arange(N)])   # add_self_loops
    dst = np.concatenate([ei[1][keep], np.arange(N)])

    alpha_src = h @ a_s                                  # (N,)
    alpha_dst = h @ a_d
    e = alpha_src[src] + alpha_dst[dst]
    e = np.where(e > 0, e, NEG_SLOPE * e)

    out = np.zeros_like(h)
    for i in range(N):                                   # softmax grouped by destination
        idx = np.where(dst == i)[0]
        ee = e[idx] - e[idx].max()
        p = np.exp(ee)
        p = p / p.sum()
        out[i] = (p[:, None] * h[src[idx]]).sum(axis=0)
    return out + b


# ------------------------------- deterministic params ----------------------------------
def init_params(key):
    k_w, k_as, k_ad, k_b = jax.random.split(key, 4)
    scale = 0.1

    def w(k, shape):
        return (scale * jax.random.normal(k, shape)).astype(jnp.float32)

    return {
        "w": w(k_w, (INPUT_DIM, OUTPUT_DIM)),
        "att_src": w(k_as, (1, OUTPUT_DIM)),
        "att_dst": w(k_ad, (1, OUTPUT_DIM)),
        "bias": w(k_b, (1, OUTPUT_DIM)),
    }


# --------------------------------------- main ------------------------------------------
if __name__ == "__main__":
    root = jax.random.PRNGKey(0)
    k_param, k_x = jax.random.split(root)
    params = init_params(k_param)
    packed = pack_params(params)

    # B deterministic small directed graphs: ring + (b % 5) chords, no self loops,
    # no duplicate edges.
    xs, masks, edge_indices = [], [], []
    x_keys = jax.random.split(k_x, NUM_GRAPHS)
    for b in range(NUM_GRAPHS):
        xs.append(jax.random.normal(x_keys[b], (NUM_NODES, INPUT_DIM), dtype=jnp.float32))
        n_chords = b % 5
        src = list(range(NUM_NODES)) + list(range(n_chords))
        dst = ([(i + 1) % NUM_NODES for i in range(NUM_NODES)]
               + [(i + 2) % NUM_NODES for i in range(n_chords)])
        ei = jnp.array([src, dst], dtype=jnp.int32)
        edge_indices.append(ei)
        masks.append(dense_mask(ei, NUM_NODES))

    x_b = jnp.stack(xs)        # (B, N, D)
    mask_b = jnp.stack(masks)  # (B, N, N)

    out_b = jax.block_until_ready(gat_forward_batched(x_b, mask_b, packed))
    assert out_b.shape == (NUM_GRAPHS, NUM_NODES, OUTPUT_DIM)

    for b in range(NUM_GRAPHS):
        ref = reference_forward(xs[b], edge_indices[b], params)
        assert bool(jnp.allclose(out_b[b], jnp.asarray(ref), atol=1e-3, rtol=1e-3)), b

    # Module-equivalent single-graph forward (B == 1 path), matching GATNetwork.forward.
    out0 = jax.block_until_ready(gat_forward(xs[0], edge_indices[0], packed))
    ref0 = reference_forward(xs[0], edge_indices[0], params)
    assert bool(jnp.allclose(out0, jnp.asarray(ref0), atol=1e-3, rtol=1e-3))

    print("KERNEL_OK")
</pallas_src>

<mosaic_0001>
module attributes {stable_mosaic.version = 11 : i64} {
  func.func @gat_kernel(%arg0: i32, %arg1: memref<8x16xf32, #tpu.memory_space<vmem>>, %arg2: memref<8x8xf32, #tpu.memory_space<vmem>>, %arg3: memref<40x128xf32, #tpu.memory_space<vmem>>, %arg4: memref<8x128xf32, #tpu.memory_space<vmem>>) attributes {dimension_semantics = [#tpu.dimension_semantics<parallel>], iteration_bounds = array<i64: 16>, scalar_prefetch = 0 : i64, scratch_operands = 0 : i64, tpu.core_type = #tpu.core_type<tc>, window_params = [{transform_indices = @transform_0, window_bounds = array<i64: 8, 16>}, {transform_indices = @transform_1, window_bounds = array<i64: 8, 8>}, {pipeline_mode = #tpu.pipeline_mode<synchronous>, transform_indices = @transform_2, window_bounds = array<i64: 40, 128>}, {transform_indices = @transform_3, window_bounds = array<i64: 8, 128>}]} {
    %c0 = arith.constant 0 : index
    %c0_0 = arith.constant 0 : index
    %0 = vector.load %arg3[%c0, %c0_0] : memref<40x128xf32, #tpu.memory_space<vmem>>, vector<16x128xf32>
    %c16 = arith.constant 16 : index
    %c0_1 = arith.constant 0 : index
    %1 = vector.load %arg3[%c16, %c0_1] : memref<40x128xf32, #tpu.memory_space<vmem>>, vector<1x128xf32>
    %c24 = arith.constant 24 : index
    %c0_2 = arith.constant 0 : index
    %2 = vector.load %arg3[%c24, %c0_2] : memref<40x128xf32, #tpu.memory_space<vmem>>, vector<1x128xf32>
    %c32 = arith.constant 32 : index
    %c0_3 = arith.constant 0 : index
    %3 = vector.load %arg3[%c32, %c0_3] : memref<40x128xf32, #tpu.memory_space<vmem>>, vector<1x128xf32>
    %c0_4 = arith.constant 0 : index
    %c0_5 = arith.constant 0 : index
    %4 = vector.load %arg1[%c0_4, %c0_5] : memref<8x16xf32, #tpu.memory_space<vmem>>, vector<8x16xf32>
    %cst = arith.constant dense<0.000000e+00> : vector<8x128xf32>
    %5 = tpu.matmul %4, %0, %cst {dimension_numbers = #tpu.dot_dimension_numbers<[1], [0], [0], [1], [0, 0, 1, 1], [], []>} : vector<8x16xf32>, vector<16x128xf32>, vector<8x128xf32> -> vector<8x128xf32>
    %cst_6 = arith.constant dense<0.000000e+00> : vector<1x8xf32>
    %6 = tpu.matmul %1, %5, %cst_6 {dimension_numbers = #tpu.dot_dimension_numbers<[1], [1], [0], [0], [0, 0, 1, 0], [], []>} : vector<1x128xf32>, vector<8x128xf32>, vector<1x8xf32> -> vector<1x8xf32>
    %cst_7 = arith.constant dense<0.000000e+00> : vector<8x1xf32>
    %7 = tpu.matmul %5, %2, %cst_7 {dimension_numbers = #tpu.dot_dimension_numbers<[1], [1], [0], [0], [0, 0, 1, 0], [], []>} : vector<8x128xf32>, vector<1x128xf32>, vector<8x1xf32> -> vector<8x1xf32>
    %8 = vector.broadcast %7 : vector<8x1xf32> to vector<8x8xf32>
    %9 = vector.broadcast %6 : vector<1x8xf32> to vector<8x8xf32>
    %10 = arith.addf %8, %9 : vector<8x8xf32>
    %cst_8 = arith.constant 0.000000e+00 : f32
    %11 = vector.broadcast %cst_8 : f32 to vector<8x8xf32>
    %12 = arith.cmpf ogt, %10, %11 : vector<8x8xf32>
    %cst_9 = arith.constant 2.000000e-01 : f32
    %13 = vector.broadcast %cst_9 : f32 to vector<8x8xf32>
    %14 = arith.mulf %13, %10 : vector<8x8xf32>
    %15 = arith.select %12, %10, %14 : vector<8x8xi1>, vector<8x8xf32>
    %c0_10 = arith.constant 0 : index
    %c0_11 = arith.constant 0 : index
    %16 = vector.load %arg2[%c0_10, %c0_11] : memref<8x8xf32, #tpu.memory_space<vmem>>, vector<8x8xf32>
    %cst_12 = arith.constant 0.000000e+00 : f32
    %17 = vector.broadcast %cst_12 : f32 to vector<8x8xf32>
    %18 = arith.cmpf ogt, %16, %17 : vector<8x8xf32>
    %cst_13 = arith.constant -1.000000e+30 : f32
    %19 = vector.broadcast %cst_13 : f32 to vector<8x8xf32>
    %20 = arith.select %18, %15, %19 : vector<8x8xi1>, vector<8x8xf32>
    %cst_14 = arith.constant dense<0xFF800000> : vector<8xf32>
    %21 = vector.multi_reduction <maximumf>, %20, %cst_14 [1] : vector<8x8xf32> to vector<8xf32>
    %22 = vector.shape_cast %21 : vector<8xf32> to vector<8x1xf32>
    %23 = vector.broadcast %22 : vector<8x1xf32> to vector<8x8xf32>
    %24 = arith.subf %20, %23 : vector<8x8xf32>
    %25 = math.exp %24 : vector<8x8xf32>
    %cst_15 = arith.constant dense<0.000000e+00> : vector<8xf32>
    %26 = vector.multi_reduction <add>, %25, %cst_15 [1] : vector<8x8xf32> to vector<8xf32>
    %27 = vector.shape_cast %26 : vector<8xf32> to vector<8x1xf32>
    %28 = tpu.reciprocal %27 {approx = true} : vector<8x1xf32> -> vector<8x1xf32>
    %29 = arith.mulf %27, %28 : vector<8x1xf32>
    %cst_16 = arith.constant 2.000000e+00 : f32
    %30 = vector.broadcast %cst_16 : f32 to vector<8x1xf32>
    %31 = arith.subf %30, %29 : vector<8x1xf32>
    %32 = arith.mulf %28, %31 : vector<8x1xf32>
    %33 = vector.broadcast %32 : vector<8x1xf32> to vector<8x8xf32>
    %34 = arith.mulf %25, %33 : vector<8x8xf32>
    %cst_17 = arith.constant dense<0.000000e+00> : vector<8x128xf32>
    %35 = tpu.matmul %34, %5, %cst_17 {dimension_numbers = #tpu.dot_dimension_numbers<[1], [0], [0], [1], [0, 0, 1, 1], [], []>} : vector<8x8xf32>, vector<8x128xf32>, vector<8x128xf32> -> vector<8x128xf32>
    %36 = vector.broadcast %3 : vector<1x128xf32> to vector<8x128xf32>
    %37 = arith.addf %35, %36 : vector<8x128xf32>
    %c0_18 = arith.constant 0 : index
    %c0_19 = arith.constant 0 : index
    %38 = vector.load %arg4[%c0_18, %c0_19] : memref<8x128xf32, #tpu.memory_space<vmem>>, vector<8x128xf32>
    tpu.vector_store %arg4[%c0_18, %c0_19], %37 {strides = array<i32>} : memref<8x128xf32, #tpu.memory_space<vmem>>, vector<8x128xf32>,
    return
  }
  func.func @transform_0(%arg0: i32) -> (i32, i32) {
    %c0_i32 = arith.constant 0 : i32
    %c0_i32_0 = arith.constant 0 : i32
    return %arg0, %c0_i32 : i32, i32
  }
  func.func @transform_1(%arg0: i32) -> (i32, i32) {
    %c0_i32 = arith.constant 0 : i32
    %c0_i32_0 = arith.constant 0 : i32
    return %arg0, %c0_i32 : i32, i32
  }
  func.func @transform_2(%arg0: i32) -> (i32, i32) {
    %c0_i32 = arith.constant 0 : i32
    %c0_i32_0 = arith.constant 0 : i32
    %c0_i32_1 = arith.constant 0 : i32
    return %c0_i32, %c0_i32_0 : i32, i32
  }
  func.func @transform_3(%arg0: i32) -> (i32, i32) {
    %c0_i32 = arith.constant 0 : i32
    %c0_i32_0 = arith.constant 0 : i32
    return %arg0, %c0_i32 : i32, i32
  }
}

</mosaic_0001>

<llo_original>
// kernel: tpu_custom_call.1
$region0: #{tpu_custom_call.1}
  #allocation0 [shape = 'u32[]', space=smem, size = 0x4, offset = 0x4, fixed_abs, tag = 'smem constant byte address 0x4 - core index']
  #allocation1 [shape = 'u32[72,128]{1,0:T(1,128)}', space=vmem, size = 0x9000, scoped, tag = 'internal scratch']
  %s0 = inlined_call_operand.vmem [shape: f32[128,16], index: 0, kind: input, shape index: {}]
  %s1 = inlined_call_operand.vmem [shape: f32[128,8], index: 1, kind: input, shape index: {}]
  %s2 = inlined_call_operand.vmem [shape: f32[40,128], index: 2, kind: input, shape index: {}]
  %s3 = inlined_call_operand.hbm [shape: f32[128,128], index: 3, kind: output, shape index: {}]
  %s4 = sld [smem:[#allocation0]]
  $region45: #{tpu_custom_call.1} parent=0
    _
  %s6 = ssub.s32 1, %s4
  %s7 = scalar_select 0, %s6, %s4
  $region1: #{tpu_custom_call.1} parent=0
    #allocation2 [shape = 'u8[8192]{0}', space=vmem, size = 0x2000, scoped, tag = 'output window, operand 0']
    #allocation3 [shape = 's32[2]{0}', space=sflag, size = 0x8, scoped, tag = 'scoped memory for tpu_custom_call.1']
    %8 = vsyncpa [#allocation3], 0
    %s9 = scalar_lea.sflag [#allocation3], 1
    %10 = vsyncpa %s9, 0
    loop: start=0, step=1, limit=18
    $region2: #{tpu_custom_call.1} parent=1 // loop_pre_header
      _
    $region3: #{tpu_custom_call.1} parent=1 // loop_header
      %s12 = sphi 0, %s16
      %p13 = scmp.ge.s32.totalorder %s12, 18
      %s22 = sphi 0, %s24
      %s25 = sphi 0, %s22
      %s26 = sphi 0, %s25
      %s42 = sphi 0, %s26
      %s48 = sphi 0, %s50
      %s51 = sphi 0, %s48
      %s52 = sphi 0, %s51
      %s68 = sphi 0, %s52
      %s72 = sphi 0, %s72
      %s74 = sphi 0, %s72
      %s75 = sphi 0, %s74
      %s89 = sphi 0, %s75
      %s95 = sphi 0, %s97
      %s98 = sphi 0, %s95
      %s99 = sphi 0, %s98
      %s115 = sphi 0, %s99
    $region4: #{tpu_custom_call.1} parent=1 // loop_header_branch
      %15 = sbr.rel (%p13) target = $region8
    $region5: #{tpu_custom_call.1} parent=1 // loop_body
      %s17 = ssub.s32 %s12, 1
      %s18 = ssub.s32 %s12, 2
      %s19 = sadd.s32 %s12, 1
      %s20 = ssub.s32 %s12, %s19
      %p21 = scmp.eq.s32.totalorder %s20, 0
      %s23 = sadd.s32 %s22, 1
      %s24 = scalar_select %p21, %s22, %s23
      %p27 = pneg %p21
      %p28 = scmp.eq.s32.totalorder %s12, 15
      %p29 = por %p27, %p28
      %p30 = scmp.ne.s32.totalorder %s22, %s25
      %p31 = scmp.eq.s32.totalorder %s12, 0
      %p32 = por %p30, %p31
      %p33 = scmp.ne.s32.totalorder %s22, %s25
      %p34 = scmp.eq.s32.totalorder %s17, 15
      %p35 = por %p33, %p34
      %p36 = scmp.ne.s32.totalorder %s25, %s26
      %p37 = scmp.eq.s32.totalorder %s17, 0
      %p38 = por %p36, %p37
      %p39 = scmp.ne.s32.totalorder %s25, %s26
      %p40 = scmp.eq.s32.totalorder %s18, 15
      %p41 = por %p39, %p40
      %p43 = scmp.ne.s32.totalorder %s26, %s42
      %p44 = scmp.eq.s32.totalorder %s18, 0
      %p45 = por %p43, %p44
      %s46 = ssub.s32 %s12, %s19
      %p47 = scmp.eq.s32.totalorder %s46, 0
      %s49 = sadd.s32 %s48, 1
      %s50 = scalar_select %p47, %s48, %s49
      %p53 = pneg %p47
      %p54 = scmp.eq.s32.totalorder %s12, 15
      %p55 = por %p53, %p54
      %p56 = scmp.ne.s32.totalorder %s48, %s51
      %p57 = scmp.eq.s32.totalorder %s12, 0
      %p58 = por %p56, %p57
      %p59 = scmp.ne.s32.totalorder %s48, %s51
      %p60 = scmp.eq.s32.totalorder %s17, 15
      %p61 = por %p59, %p60
      %p62 = scmp.ne.s32.totalorder %s51, %s52
      %p63 = scmp.eq.s32.totalorder %s17, 0
      %p64 = por %p62, %p63
      %p65 = scmp.ne.s32.totalorder %s51, %s52
      %p66 = scmp.eq.s32.totalorder %s18, 15
      %p67 = por %p65, %p66
      %p69 = scmp.ne.s32.totalorder %s52, %s68
      %p70 = scmp.eq.s32.totalorder %s18, 0
      %p71 = por %p69, %p70
      %s73 = sadd.s32 %s72, 1
      %p76 = scmp.eq.s32.totalorder %s12, 15
      %p77 = scmp.ne.s32.totalorder %s72, %s74
      %p78 = scmp.eq.s32.totalorder %s12, 0
      %p79 = por %p77, %p78
      %p80 = scmp.ne.s32.totalorder %s72, %s74
      %p81 = scmp.eq.s32.totalorder %s17, 15
      %p82 = por %p80, %p81
      %p83 = scmp.ne.s32.totalorder %s74, %s75
      %p84 = scmp.eq.s32.totalorder %s17, 0
      %p85 = por %p83, %p84
      %p86 = scmp.ne.s32.totalorder %s74, %s75
      %p87 = scmp.eq.s32.totalorder %s18, 15
      %p88 = por %p86, %p87
      %p90 = scmp.ne.s32.totalorder %s75, %s89
      %p91 = scmp.eq.s32.totalorder %s18, 0
      %p92 = por %p90, %p91
      %s93 = ssub.s32 %s12, %s19
      %p94 = scmp.eq.s32.totalorder %s93, 0
      %s96 = sadd.s32 %s95, 1
      %s97 = scalar_select %p94, %s95, %s96
      %p100 = pneg %p94
      %p101 = scmp.eq.s32.totalorder %s12, 15
      %p102 = por %p100, %p101
      %p103 = scmp.ne.s32.totalorder %s95, %s98
      %p104 = scmp.eq.s32.totalorder %s12, 0
      %p105 = por %p103, %p104
      %p106 = scmp.ne.s32.totalorder %s95, %s98
      %p107 = scmp.eq.s32.totalorder %s17, 15
      %p108 = por %p106, %p107
      %p109 = scmp.ne.s32.totalorder %s98, %s99
      %p110 = scmp.eq.s32.totalorder %s17, 0
      %p111 = por %p109, %p110
      %p112 = scmp.ne.s32.totalorder %s98, %s99
      %p113 = scmp.eq.s32.totalorder %s18, 15
      %p114 = por %p112, %p113
      %p116 = scmp.ne.s32.totalorder %s99, %s115
      %p117 = scmp.eq.s32.totalorder %s18, 0
      %p118 = por %p116, %p117
      %p119 = scmp.le.s32.totalorder 1, %s12
      %p120 = scmp.lt.s32.totalorder %s12, 17
      %p121 = pnand %p119, %p120
      %p122 = pneg %p121
      // Predicated region
      $region9: #{tpu_custom_call.1} parent=5 // pred_check
        _
      $region10: #{tpu_custom_call.1} parent=5 // pred_check_branch
        %124 = sbr.rel (%p121) target = $region12
      $region11: #{tpu_custom_call.1} parent=5 // pred_region
        %s125 = ssub.s32 %s12, 1
        // Predicated region
        $region13: #{tpu_custom_call.1} parent=11 // pred_check
          %p126 = pneg %p85
        $region14: #{tpu_custom_call.1} parent=11 // pred_check_branch
          %128 = sbr.rel (%p126) target = $region16
        $region15: #{tpu_custom_call.1} parent=11 // pred_region
          _
        $region16: #{tpu_custom_call.1} parent=11 // pred_fallthru
          _
      $region12: #{tpu_custom_call.1} parent=5 // pred_fallthru
        _
      %p129 = scmp.lt.s32.totalorder %s12, 16
      // Predicated region
      $region17: #{tpu_custom_call.1} parent=5 // pred_check
        %p130 = pneg %p129
      $region18: #{tpu_custom_call.1} parent=5 // pred_check_branch
        %132 = sbr.rel (%p130) target = $region20
      $region19: #{tpu_custom_call.1} parent=5 // pred_region
        // Predicated region
        $region21: #{tpu_custom_call.1} parent=19 // pred_check
          %p133 = pneg %p32
        $region22: #{tpu_custom_call.1} parent=19 // pred_check_branch
          %135 = sbr.rel (%p133) target = $region24
        $region23: #{tpu_custom_call.1} parent=19 // pred_region
          %p136 = scmp.lt.s32.totalorder %s12, 15
          %s137 = scalar_select %p136, %s12, 15
          %s138 = smul.addr %s137, 8
          %s139 = scalar_lea.vmem %s0, %s138
        $region24: #{tpu_custom_call.1} parent=19 // pred_fallthru
          _
        // Predicated region
        $region25: #{tpu_custom_call.1} parent=19 // pred_check
          %p140 = pneg %p58
        $region26: #{tpu_custom_call.1} parent=19 // pred_check_branch
          %142 = sbr.rel (%p140) target = $region28
        $region27: #{tpu_custom_call.1} parent=19 // pred_region
          %p143 = scmp.lt.s32.totalorder %s12, 15
          %s144 = scalar_select %p143, %s12, 15
          %s145 = smul.addr %s144, 8
          %s146 = scalar_lea.vmem %s1, %s145
        $region28: #{tpu_custom_call.1} parent=19 // pred_fallthru
          _
      $region20: #{tpu_custom_call.1} parent=5 // pred_fallthru
        _
      %p147 = scmp.le.s32.totalorder 1, %s12
      %p148 = scmp.lt.s32.totalorder %s12, 17
      %p149 = pnand %p147, %p148
      %p150 = pneg %p149
      // Predicated region
      $region29: #{tpu_custom_call.1} parent=5 // pred_check
        _
      $region30: #{tpu_custom_call.1} parent=5 // pred_check_branch
        %152 = sbr.rel (%p149) target = $region32
      $region31: #{tpu_custom_call.1} parent=5 // pred_region
        %s153 = ssub.s32 %s12, 1
        %p154 = scmp.lt.s32.totalorder %s17, 15
        %s155 = scalar_select %p154, %s17, 15
        %s156 = smul.addr %s155, 8
        %s157 = scalar_lea.vmem %s0, %s156
        %p158 = pneg %p38
        %p159 = pneg %p35
        %p160 = scmp.lt.s32.totalorder %s17, 15
        %s161 = scalar_select %p160, %s17, 15
        %s162 = smul.addr %s161, 8
        %s163 = scalar_lea.vmem %s1, %s162
        %p164 = pneg %p64
        %p165 = pneg %p61
        %p166 = pneg %p85
        %p167 = pneg %p82
        %p168 = pneg %p111
        %p169 = pneg %p108
        %s170 = sand.u32 %s98, 1
        %s171 = scalar_lea.sflag [#allocation3], %s170
        %s172 = sand.u32 %s98, 1
        %s173 = smul.addr %s172, 8
        %s174 = scalar_lea.vmem [#allocation2], %s173
        %p175 = scmp.lt.s32.totalorder %s17, 15
        %s176 = scalar_select %p175, %s17, 15
        %s177 = smul.addr %s176, 8
        %s178 = scalar_lea.vmem %s0, %s177
        %p179 = scmp.lt.s32.totalorder %s17, 15
        %s180 = scalar_select %p179, %s17, 15
        %s181 = smul.addr %s180, 8
        %s182 = scalar_lea.vmem %s1, %s181
        %v183 = vld [vmem:[%s2] sm:$0xff]
        %v184 = vld [vmem:[%s2 + $0x8] sm:$0xff]
        %v185 = vld [vmem:[%s2 + $0x10] sm:$0x1]
        %v186 = vld [vmem:[%s2 + $0x18] sm:$0x1]
        %v187 = vld [vmem:[%s2 + $0x20] sm:$0x1]
        %v188 = vld [vmem:[%s178] sm:$0xff]
        %vm189 = vcmask 130048
        %v191 = vsel %vm189, %v188, 0
        %193 = vmatpush.msra.mxu0 0.0
        %194 = vmatpush.msra.mxu0 0.0
        %195 = vmatpush.msra.mxu0 0.0
        %196 = vmatpush.msra.mxu0 0.0
        %197 = vmatpush.msra.mxu0 0.0
        %198 = vmatpush.msra.mxu0 0.0
        %199 = vmatpush.msra.mxu0 0.0
        %200 = vmatpush.msra.mxu0 0.0
        %201 = vmatpush.msra.mxu0 0.0
        %202 = vmatpush.msra.mxu0 0.0
        %203 = vmatpush.msra.mxu0 0.0
        %204 = vmatpush.msra.mxu0 0.0
        %205 = vmatpush.msra.mxu0 0.0
        %206 = vmatpush.msra.mxu0 0.0
        %207 = vmatpush.msra.mxu0 %v184
        %208 = vmatpush.msra.mxu0 %v183
        %209 = vmatmul.f32.gmra.mxu0 %v191
        %v210 = vpop.f32.mrf.mxu0
        %v211 = vadd.f32 0.0, %v210
        %212 = vdwg.mxu0
        %213 = vmatpush.xpose.msra.mxu0 0.0
        %214 = vmatpush.xpose.msra.mxu0 0.0
        %215 = vmatpush.xpose.msra.mxu0 0.0
        %216 = vmatpush.xpose.msra.mxu0 0.0
        %217 = vmatpush.xpose.msra.mxu0 0.0
        %218 = vmatpush.xpose.msra.mxu0 0.0
        %219 = vmatpush.xpose.msra.mxu0 0.0
        %220 = vmatpush.xpose.msra.mxu0 0.0
        %221 = vmatpush.xpose.msra.mxu0 0.0
        %222 = vmatpush.xpose.msra.mxu0 0.0
        %223 = vmatpush.xpose.msra.mxu0 0.0
        %224 = vmatpush.xpose.msra.mxu0 0.0
        %225 = vmatpush.xpose.msra.mxu0 0.0
        %226 = vmatpush.xpose.msra.mxu0 0.0
        %227 = vmatpush.xpose.msra.mxu0 0.0
        %228 = vmatpush.xpose.msra.mxu0 %v211
        %229 = vmatmul.f32.gmra.mxu0 %v185
        %v230 = vpop.f32.mrf.mxu0
        %v231 = vadd.f32 0.0, %v230
        %232 = vdwg.mxu0
        %v233 = vperm.slane %v186, 0
        %v234 = vmul.f32 %v211, %v233
        %235 = vadd.xlane.f32.xlu0 %v234
        %v236 = vpop.xlane.xlu0 %235
        %v237 = vperm.slane %v231, 0
        %v238 = vadd.f32 %v236, %v237
        %vm239 = vcmp.gt.f32.partialorder %v238, 0.0
        %v240 = vmul.f32 %v238, 0.2
        %v241 = vsel %vm239, %v238, %v240
        %v242 = vld [vmem:[%s182] sm:$0xff]
        %vm243 = vcmp.gt.f32.partialorder %v242, 0.0
        %v244 = vsel %vm243, %v241, -1e+30
        %vm245 = vcmask 64512
        %v246 = vsel %vm245, %v244, -inf
        %247 = vmax.xlane.f32.xlu0 %v246
        %v248 = vpop.xlane.xlu0 %247
        %v249 = vsub.f32 %v244, %v248
        %v250 = vmul.f32 %v249, 1.442695
        %v251 = vpow.pop %v250
        %v252 = vsel %vm245, %v251, 0.0
        %253 = vadd.xlane.f32.xlu0 %v252
        %v254 = vpop.xlane.xlu0 %253
        %v255 = vrcp.pop %v254
        %v256 = vmul.f32 %v254, %v255
        %v257 = vsub.f32 2.0, %v256
        %v258 = vmul.f32 %v255, %v257
        %v259 = vmul.f32 %v251, %v258
        %v260 = vperm.slane %v187, 0
        %v262 = vsel %vm245, %v259, 0
        %264 = vmatpush.msra.mxu0 0.0
        %265 = vmatpush.msra.mxu0 0.0
        %266 = vmatpush.msra.mxu0 0.0
        %267 = vmatpush.msra.mxu0 0.0
        %268 = vmatpush.msra.mxu0 0.0
        %269 = vmatpush.msra.mxu0 0.0
        %270 = vmatpush.msra.mxu0 0.0
        %271 = vmatpush.msra.mxu0 0.0
        %272 = vmatpush.msra.mxu0 0.0
        %273 = vmatpush.msra.mxu0 0.0
        %274 = vmatpush.msra.mxu0 0.0
        %275 = vmatpush.msra.mxu0 0.0
        %276 = vmatpush.msra.mxu0 0.0
        %277 = vmatpush.msra.mxu0 0.0
        %278 = vmatpush.msra.mxu0 0.0
        %279 = vmatpush.msra.mxu0 %v211
        %280 = vmatmul.f32.gmra.mxu0 %v262
        %v281 = vpop.f32.mrf.mxu0
        %v282 = vadd.f32 %v260, %v281
        %283 = vdwg.mxu0
        %284 = vst [vmem:[%s174] sm:$0xff] %v282
        %s285 = sand.u32 %s98, 1
        %s286 = scalar_lea.sflag [#allocation3], %s285
        %s287 = sand.u32 %s98, 1
        %s288 = smul.addr %s287, 8
        %s289 = scalar_lea.vmem [#allocation2], %s288
        // Predicated region
        $region33: #{tpu_custom_call.1} parent=31 // pred_check
          %p290 = pneg %p108
        $region34: #{tpu_custom_call.1} parent=31 // pred_check_branch
          %292 = sbr.rel (%p290) target = $region36
        $region35: #{tpu_custom_call.1} parent=31 // pred_region
          %294 = vsyncadd %s286, 0
          %s295 = smul.addr %s17, 8
          %s296 = scalar_lea.hbm %s3, %s295
          %s298 = sshll.u32 %s289, 4
          %s299 = int_to_ptr.vmem [resolvable:$true] %s298
          %s300 = sshll.u32 %s296, 4
          %s301 = int_to_ptr.hbm [resolvable:$true] %s300
          %303 = dma.vmem_to_hbm [thread:$0]  %s299, 128, %s301, %s286
        $region36: #{tpu_custom_call.1} parent=31 // pred_fallthru
          _
      $region32: #{tpu_custom_call.1} parent=5 // pred_fallthru
        _
      %p304 = scmp.le.s32.totalorder 2, %s12
      // Predicated region
      $region37: #{tpu_custom_call.1} parent=5 // pred_check
        %p305 = pneg %p304
      $region38: #{tpu_custom_call.1} parent=5 // pred_check_branch
        %307 = sbr.rel (%p305) target = $region40
      $region39: #{tpu_custom_call.1} parent=5 // pred_region
        %s308 = ssub.s32 %s12, 2
        // Predicated region
        $region41: #{tpu_custom_call.1} parent=39 // pred_check
          %p309 = pneg %p114
        $region42: #{tpu_custom_call.1} parent=39 // pred_check_branch
          %311 = sbr.rel (%p309) target = $region44
        $region43: #{tpu_custom_call.1} parent=39 // pred_region
          %s312 = sand.u32 %s99, 1
          %s313 = scalar_lea.sflag [#allocation3], %s312
          %s314 = sand.u32 %s99, 1
          %s315 = smul.addr %s314, 8
          %s316 = scalar_lea.vmem [#allocation2], %s315
          %318 = dma.done %s313, 128
        $region44: #{tpu_custom_call.1} parent=39 // pred_fallthru
          _
      $region40: #{tpu_custom_call.1} parent=5 // pred_fallthru
        _
    $region6: #{tpu_custom_call.1} parent=1 // loop_footer
      %s16 = sadd.s32 1, %s12
    $region7: #{tpu_custom_call.1} parent=1 // loop_footer_branch
      %11 = sbr.rel target = $region3
    $region8: #{tpu_custom_call.1} parent=1 // loop_exit
      _
    %319 = vsyncpa [#allocation3], 1
    %s320 = scalar_lea.sflag [#allocation3], 1
    %321 = vsyncpa %s320, 1

</llo_original>
